<compile_context>
chip_gen: v5e
topology: v5e:2x2
jax: 0.10.0
libtpu: 0.0.40
codegen_flags: <defaults>
</compile_context>

<pallas_src>
import math

import jax
import jax.numpy as jnp
from jax import lax
from jax.experimental import pallas as pl
from jax.experimental.pallas import tpu as pltpu  # noqa: F401  (kept for TPU backend import)

# ----------------------------- configuration -----------------------------
B = 2            # batch
S = 8            # sequence length (number of graph nodes)
F_IN = 16        # in_features
F_OUT = 32       # out_features
H = 4            # num_heads
D = F_OUT // H   # head_dim
BS = B * S       # 16
HBS = H * B * S  # 64
NEG_INF = -9.0e15        # matches -9000000000000000.0 in the PyTorch module
CROSS_NEG = -1.0e38      # cross-(head,batch) block fill: strictly below NEG_INF, no infs
SCALE = 1.0 / math.sqrt(D)


# ------------------------------- kernel ----------------------------------
def mha_kernel(x_ref, wqkv_ref, wo_ref, bias_ref, fill_ref, o_ref):
    # x_ref:    (B*S, F_IN)          both batch elements, single invocation
    # wqkv_ref: (F_IN, 3*F_OUT)      [Wq | Wk | Wv] fused
    # wo_ref:   (F_OUT, F_OUT)
    # bias_ref: (1, 4*F_OUT) = (1,128)  [bq | bk | bv | bo]
    # fill_ref: (H*B*S, H*B*S)       0.0 keep / -9e15 masked / -1e38 cross-block
    # o_ref:    (B*S, F_OUT)
    x = x_ref[...]                                        # (16, 16)
    bias = bias_ref[...]                                  # (1, 128)

    # ---- fused QKV projection: one 2-D MXU matmul ----
    qkv = jnp.dot(x, wqkv_ref[...],
                  preferred_element_type=jnp.float32) + bias[:, :3 * F_OUT]  # (16, 96)

    q2 = qkv[:, :F_OUT] * SCALE                           # (16, 32), scale folded once
    k2 = qkv[:, F_OUT:2 * F_OUT]                          # (16, 32)
    v2 = qkv[:, 2 * F_OUT:]                               # (16, 32)

    # ---- relayout (B*S, H*D) -> (H*B*S, D): rows ordered (h, b, s) ----
    def to_big(t):
        return jnp.concatenate([t[:, h * D:(h + 1) * D] for h in range(H)], axis=0)

    qb = to_big(q2)                                       # (64, 8)
    kb = to_big(k2)                                       # (64, 8)
    vb = to_big(v2)                                       # (64, 8)

    # ---- block-diagonal attention: one MXU pass for all heads & batches ----
    s = lax.dot_general(qb, kb,
                        dimension_numbers=(((1,), (1,)), ((), ())),
                        preferred_element_type=jnp.float32)           # (64, 64)

    fill = fill_ref[...]
    s = jnp.where(fill >= 0.0, s, fill)                   # keep / -9e15 / -1e38

    # numerically-stable softmax over the (big) key axis; cross-block and
    # masked entries contribute exactly 0 after exp.
    m = jnp.max(s, axis=-1, keepdims=True)
    p = jnp.exp(s - m)
    p = p * pl.reciprocal(jnp.sum(p, axis=-1, keepdims=True), approx=False)
    # TODO(synk): F.dropout(attention, 0.6) is stochastic; eval-mode (no dropout) implemented.

    # ---- attention @ V: second single MXU pass ----
    ctx = jnp.dot(p, vb, preferred_element_type=jnp.float32)          # (64, 8)

    # ---- relayout back (H*B*S, D) -> (B*S, H*D), then one output matmul ----
    ctx2d = jnp.concatenate([ctx[h * BS:(h + 1) * BS, :] for h in range(H)],
                            axis=1)                                   # (16, 32)
    out = jnp.dot(ctx2d, wo_ref[...],
                  preferred_element_type=jnp.float32) + bias[:, 3 * F_OUT:]
    o_ref[...] = out.astype(o_ref.dtype)


# ------------------------- host-side packing ------------------------------
def pack_params(params):
    """(in,out) linear weights -> fused 2-D layouts (done once in XLA)."""
    wq, bq, wk, bk, wv, bv, wo, bo = params
    w_qkv = jnp.concatenate([wq, wk, wv], axis=1)            # (F_IN, 3*F_OUT)
    b_all = jnp.concatenate([bq, bk, bv, bo], axis=1)        # (1, 4*F_OUT) = (1,128)
    return w_qkv, wo, b_all


def build_fill(adj):
    """(B,S,S) adjacency -> (H*B*S, H*B*S) fill for the block-diagonal scores.

    0.0 where the score is kept, NEG_INF where adj==0 inside a (h,b) block
    (exactly the PyTorch fill value), CROSS_NEG outside the diagonal blocks.
    """
    blk = jnp.where(adj > 0, 0.0, NEG_INF).astype(jnp.float32)          # (B,S,S)
    hb = jnp.broadcast_to(blk[None], (H, B, S, S)).reshape(H * B, S, S)  # (HB,S,S)
    eye = jnp.eye(H * B, dtype=bool)                                    # (HB,HB)
    fill4 = jnp.where(eye[:, :, None, None], hb[:, None, :, :],
                      jnp.float32(CROSS_NEG))                           # (HB,HB,S,S)
    return fill4.transpose(0, 2, 1, 3).reshape(HBS, HBS)                # (64,64)


# ------------------------------- wrapper ----------------------------------
def multi_head_attention(x, adj, params):
    w_qkv, wo, b_all = pack_params(params)
    x2d = x.reshape(BS, F_IN)
    fill = build_fill(adj)

    out2d = pl.pallas_call(
        mha_kernel,
        out_shape=jax.ShapeDtypeStruct((BS, F_OUT), x.dtype),
    )(x2d, w_qkv, wo, b_all, fill)

    return out2d.reshape(B, S, F_OUT)


# ------------------------- pure-JAX reference -----------------------------
def reference(x, adj, params):
    (wq, bq, wk, bk, wv, bv, wo, bo) = params
    q = (x @ wq + bq).reshape(B, S, H, D).transpose(0, 2, 1, 3)
    k = (x @ wk + bk).reshape(B, S, H, D).transpose(0, 2, 1, 3)
    v = (x @ wv + bv).reshape(B, S, H, D).transpose(0, 2, 1, 3)
    scores = jnp.einsum('bhqd,bhkd->bhqk', q, k) / math.sqrt(D)
    mask = (adj > 0)[:, None, :, :]
    scores = jnp.where(mask, scores, jnp.full_like(scores, NEG_INF))
    attn = jax.nn.softmax(scores, axis=-1)
    out = jnp.einsum('bhqk,bhkd->bhqd', attn, v)
    out = out.transpose(0, 2, 1, 3).reshape(B, S, F_OUT)
    return out @ wo + bo


# ----------------------- deterministic param init -------------------------
def xavier_uniform(key, fan_in, fan_out):
    limit = math.sqrt(6.0 / (fan_in + fan_out))
    # stored directly as (in, out) so the math is x @ W
    return jax.random.uniform(key, (fan_in, fan_out), jnp.float32, -limit, limit)


def make_params(key):
    ks = jax.random.split(key, 8)
    wq = xavier_uniform(ks[0], F_IN, F_OUT)
    wk = xavier_uniform(ks[1], F_IN, F_OUT)
    wv = xavier_uniform(ks[2], F_IN, F_OUT)
    wo = xavier_uniform(ks[3], F_OUT, F_OUT)
    bound_in = 1.0 / math.sqrt(F_IN)
    bound_out = 1.0 / math.sqrt(F_OUT)
    bq = jax.random.uniform(ks[4], (1, F_OUT), jnp.float32, -bound_in, bound_in)
    bk = jax.random.uniform(ks[5], (1, F_OUT), jnp.float32, -bound_in, bound_in)
    bv = jax.random.uniform(ks[6], (1, F_OUT), jnp.float32, -bound_in, bound_in)
    bo = jax.random.uniform(ks[7], (1, F_OUT), jnp.float32, -bound_out, bound_out)
    return (wq, bq, wk, bk, wv, bv, wo, bo)


if __name__ == "__main__":
    key = jax.random.PRNGKey(0)
    k_x, k_adj, k_p = jax.random.split(key, 3)

    x = jax.random.normal(k_x, (B, S, F_IN), jnp.float32)
    # random 0/1 adjacency with self-loops so every row can attend somewhere
    adj = (jax.random.uniform(k_adj, (B, S, S)) > 0.5).astype(jnp.float32)
    adj = jnp.maximum(adj, jnp.eye(S, dtype=jnp.float32)[None])

    params = make_params(k_p)

    out = multi_head_attention(x, adj, params)
    out = jax.block_until_ready(out)

    ref = reference(x, adj, params)
    assert out.shape == (B, S, F_OUT)
    assert jnp.allclose(out, ref, atol=1e-4, rtol=1e-4), "mismatch vs reference"

    print("KERNEL_OK")
</pallas_src>

<mosaic_0001>
module attributes {stable_mosaic.version = 11 : i64} {
  func.func @mha_kernel(%arg0: memref<16x16xf32, #tpu.memory_space<vmem>>, %arg1: memref<16x96xf32, #tpu.memory_space<vmem>>, %arg2: memref<32x32xf32, #tpu.memory_space<vmem>>, %arg3: memref<1x128xf32, #tpu.memory_space<vmem>>, %arg4: memref<64x64xf32, #tpu.memory_space<vmem>>, %arg5: memref<16x32xf32, #tpu.memory_space<vmem>>) attributes {dimension_semantics = [], scalar_prefetch = 0 : i64, scratch_operands = 0 : i64, tpu.core_type = #tpu.core_type<tc>} {
    %c0 = arith.constant 0 : index
    %c0_0 = arith.constant 0 : index
    %0 = vector.load %arg0[%c0, %c0_0] : memref<16x16xf32, #tpu.memory_space<vmem>>, vector<16x16xf32>
    %c0_1 = arith.constant 0 : index
    %c0_2 = arith.constant 0 : index
    %1 = vector.load %arg3[%c0_1, %c0_2] : memref<1x128xf32, #tpu.memory_space<vmem>>, vector<1x128xf32>
    %c0_3 = arith.constant 0 : index
    %c0_4 = arith.constant 0 : index
    %2 = vector.load %arg1[%c0_3, %c0_4] : memref<16x96xf32, #tpu.memory_space<vmem>>, vector<16x96xf32>
    %cst = arith.constant dense<0.000000e+00> : vector<16x96xf32>
    %3 = tpu.matmul %0, %2, %cst {dimension_numbers = #tpu.dot_dimension_numbers<[1], [0], [0], [1], [0, 0, 1, 1], [], []>} : vector<16x16xf32>, vector<16x96xf32>, vector<16x96xf32> -> vector<16x96xf32>
    %4 = vector.extract_strided_slice %1 {offsets = [0, 0], sizes = [1, 96], strides = [1, 1]} : vector<1x128xf32> to vector<1x96xf32>
    %5 = vector.broadcast %4 : vector<1x96xf32> to vector<16x96xf32>
    %6 = arith.addf %3, %5 : vector<16x96xf32>
    %7 = vector.extract_strided_slice %6 {offsets = [0, 0], sizes = [16, 32], strides = [1, 1]} : vector<16x96xf32> to vector<16x32xf32>
    %cst_5 = arith.constant 0.353553385 : f32
    %8 = vector.broadcast %cst_5 : f32 to vector<16x32xf32>
    %9 = arith.mulf %7, %8 : vector<16x32xf32>
    %10 = vector.extract_strided_slice %6 {offsets = [0, 32], sizes = [16, 32], strides = [1, 1]} : vector<16x96xf32> to vector<16x32xf32>
    %11 = vector.extract_strided_slice %6 {offsets = [0, 64], sizes = [16, 32], strides = [1, 1]} : vector<16x96xf32> to vector<16x32xf32>
    %12 = vector.extract_strided_slice %9 {offsets = [0, 0], sizes = [16, 8], strides = [1, 1]} : vector<16x32xf32> to vector<16x8xf32>
    %13 = vector.extract_strided_slice %9 {offsets = [0, 8], sizes = [16, 8], strides = [1, 1]} : vector<16x32xf32> to vector<16x8xf32>
    %14 = vector.extract_strided_slice %9 {offsets = [0, 16], sizes = [16, 8], strides = [1, 1]} : vector<16x32xf32> to vector<16x8xf32>
    %15 = vector.extract_strided_slice %9 {offsets = [0, 24], sizes = [16, 8], strides = [1, 1]} : vector<16x32xf32> to vector<16x8xf32>
    %16 = tpu.concatenate %12, %13, %14, %15 in 0 : vector<16x8xf32>, vector<16x8xf32>, vector<16x8xf32>, vector<16x8xf32> -> vector<64x8xf32>
    %17 = vector.extract_strided_slice %10 {offsets = [0, 0], sizes = [16, 8], strides = [1, 1]} : vector<16x32xf32> to vector<16x8xf32>
    %18 = vector.extract_strided_slice %10 {offsets = [0, 8], sizes = [16, 8], strides = [1, 1]} : vector<16x32xf32> to vector<16x8xf32>
    %19 = vector.extract_strided_slice %10 {offsets = [0, 16], sizes = [16, 8], strides = [1, 1]} : vector<16x32xf32> to vector<16x8xf32>
    %20 = vector.extract_strided_slice %10 {offsets = [0, 24], sizes = [16, 8], strides = [1, 1]} : vector<16x32xf32> to vector<16x8xf32>
    %21 = tpu.concatenate %17, %18, %19, %20 in 0 : vector<16x8xf32>, vector<16x8xf32>, vector<16x8xf32>, vector<16x8xf32> -> vector<64x8xf32>
    %22 = vector.extract_strided_slice %11 {offsets = [0, 0], sizes = [16, 8], strides = [1, 1]} : vector<16x32xf32> to vector<16x8xf32>
    %23 = vector.extract_strided_slice %11 {offsets = [0, 8], sizes = [16, 8], strides = [1, 1]} : vector<16x32xf32> to vector<16x8xf32>
    %24 = vector.extract_strided_slice %11 {offsets = [0, 16], sizes = [16, 8], strides = [1, 1]} : vector<16x32xf32> to vector<16x8xf32>
    %25 = vector.extract_strided_slice %11 {offsets = [0, 24], sizes = [16, 8], strides = [1, 1]} : vector<16x32xf32> to vector<16x8xf32>
    %26 = tpu.concatenate %22, %23, %24, %25 in 0 : vector<16x8xf32>, vector<16x8xf32>, vector<16x8xf32>, vector<16x8xf32> -> vector<64x8xf32>
    %cst_6 = arith.constant dense<0.000000e+00> : vector<64x64xf32>
    %27 = tpu.matmul %16, %21, %cst_6 {dimension_numbers = #tpu.dot_dimension_numbers<[1], [1], [0], [0], [0, 0, 1, 0], [], []>} : vector<64x8xf32>, vector<64x8xf32>, vector<64x64xf32> -> vector<64x64xf32>
    %c0_7 = arith.constant 0 : index
    %c0_8 = arith.constant 0 : index
    %28 = vector.load %arg4[%c0_7, %c0_8] : memref<64x64xf32, #tpu.memory_space<vmem>>, vector<64x64xf32>
    %cst_9 = arith.constant 0.000000e+00 : f32
    %29 = vector.broadcast %cst_9 : f32 to vector<64x64xf32>
    %30 = arith.cmpf oge, %28, %29 : vector<64x64xf32>
    %31 = arith.select %30, %27, %28 : vector<64x64xi1>, vector<64x64xf32>
    %cst_10 = arith.constant dense<0xFF800000> : vector<64xf32>
    %32 = vector.multi_reduction <maximumf>, %31, %cst_10 [1] : vector<64x64xf32> to vector<64xf32>
    %33 = vector.shape_cast %32 : vector<64xf32> to vector<64x1xf32>
    %34 = vector.broadcast %33 : vector<64x1xf32> to vector<64x64xf32>
    %35 = arith.subf %31, %34 : vector<64x64xf32>
    %36 = math.exp %35 : vector<64x64xf32>
    %cst_11 = arith.constant dense<0.000000e+00> : vector<64xf32>
    %37 = vector.multi_reduction <add>, %36, %cst_11 [1] : vector<64x64xf32> to vector<64xf32>
    %38 = vector.shape_cast %37 : vector<64xf32> to vector<64x1xf32>
    %39 = tpu.reciprocal %38 : vector<64x1xf32> -> vector<64x1xf32>
    %40 = vector.broadcast %39 : vector<64x1xf32> to vector<64x64xf32>
    %41 = arith.mulf %36, %40 : vector<64x64xf32>
    %cst_12 = arith.constant dense<0.000000e+00> : vector<64x8xf32>
    %42 = tpu.matmul %41, %26, %cst_12 {dimension_numbers = #tpu.dot_dimension_numbers<[1], [0], [0], [1], [0, 0, 1, 1], [], []>} : vector<64x64xf32>, vector<64x8xf32>, vector<64x8xf32> -> vector<64x8xf32>
    %43 = vector.extract_strided_slice %42 {offsets = [0, 0], sizes = [16, 8], strides = [1, 1]} : vector<64x8xf32> to vector<16x8xf32>
    %44 = vector.extract_strided_slice %42 {offsets = [16, 0], sizes = [16, 8], strides = [1, 1]} : vector<64x8xf32> to vector<16x8xf32>
    %45 = vector.extract_strided_slice %42 {offsets = [32, 0], sizes = [16, 8], strides = [1, 1]} : vector<64x8xf32> to vector<16x8xf32>
    %46 = vector.extract_strided_slice %42 {offsets = [48, 0], sizes = [16, 8], strides = [1, 1]} : vector<64x8xf32> to vector<16x8xf32>
    %47 = tpu.concatenate %43, %44, %45, %46 in 1 : vector<16x8xf32>, vector<16x8xf32>, vector<16x8xf32>, vector<16x8xf32> -> vector<16x32xf32>
    %c0_13 = arith.constant 0 : index
    %c0_14 = arith.constant 0 : index
    %48 = vector.load %arg2[%c0_13, %c0_14] : memref<32x32xf32, #tpu.memory_space<vmem>>, vector<32x32xf32>
    %cst_15 = arith.constant dense<0.000000e+00> : vector<16x32xf32>
    %49 = tpu.matmul %47, %48, %cst_15 {dimension_numbers = #tpu.dot_dimension_numbers<[1], [0], [0], [1], [0, 0, 1, 1], [], []>} : vector<16x32xf32>, vector<32x32xf32>, vector<16x32xf32> -> vector<16x32xf32>
    %50 = vector.extract_strided_slice %1 {offsets = [0, 96], sizes = [1, 32], strides = [1, 1]} : vector<1x128xf32> to vector<1x32xf32>
    %51 = vector.broadcast %50 : vector<1x32xf32> to vector<16x32xf32>
    %52 = arith.addf %49, %51 : vector<16x32xf32>
    %c0_16 = arith.constant 0 : index
    %c0_17 = arith.constant 0 : index
    %53 = vector.load %arg5[%c0_16, %c0_17] : memref<16x32xf32, #tpu.memory_space<vmem>>, vector<16x32xf32>
    tpu.vector_store %arg5[%c0_16, %c0_17], %52 {strides = array<i32>} : memref<16x32xf32, #tpu.memory_space<vmem>>, vector<16x32xf32>,
    return
  }
}

</mosaic_0001>

<llo_original>
// kernel: tpu_custom_call.1
$region0: #{tpu_custom_call.1}
  #allocation0 [shape = 'u32[]', space=smem, size = 0x4, offset = 0x4, fixed_abs, tag = 'smem constant byte address 0x4 - core index']
  #allocation1 [shape = 'u32[72,128]{1,0:T(1,128)}', space=vmem, size = 0x9000, scoped, tag = 'internal scratch']
  %s0 = inlined_call_operand.hbm [shape: f32[16,16], index: 0, kind: input, shape index: {}]
  %s1 = inlined_call_operand.hbm [shape: f32[16,96], index: 1, kind: input, shape index: {}]
  %s2 = inlined_call_operand.hbm [shape: f32[32,32], index: 2, kind: input, shape index: {}]
  %s3 = inlined_call_operand.vmem [shape: f32[1,128], index: 3, kind: input, shape index: {}]
  %s4 = inlined_call_operand.hbm [shape: f32[64,64], index: 4, kind: input, shape index: {}]
  %s5 = inlined_call_operand.hbm [shape: f32[16,32], index: 5, kind: output, shape index: {}]
  %s6 = sld [smem:[#allocation0]]
  $region46: #{tpu_custom_call.1} parent=0
    _
  %s8 = ssub.s32 1, %s6
  %s9 = scalar_select 0, %s8, %s6
  $region1: #{tpu_custom_call.1} parent=0
    #allocation2 [shape = 'u8[8192]{0}', space=vmem, size = 0x2000, scoped, tag = 'input window, operand 0, single buffered']
    #allocation3 [shape = 's32[1]{0}', space=sflag, size = 0x4, scoped, tag = 'scoped memory for tpu_custom_call.1']
    #allocation4 [shape = 's32[1]{0}', space=sflag, size = 0x4, scoped, tag = 'scoped memory for tpu_custom_call.1']
    #allocation5 [shape = 'u8[8192]{0}', space=vmem, size = 0x2000, scoped, tag = 'input window, operand 1, single buffered']
    #allocation6 [shape = 's32[1]{0}', space=sflag, size = 0x4, scoped, tag = 'scoped memory for tpu_custom_call.1']
    #allocation7 [shape = 'u8[16384]{0}', space=vmem, size = 0x4000, scoped, tag = 'input window, operand 2, single buffered']
    #allocation8 [shape = 'u8[32768]{0}', space=vmem, size = 0x8000, scoped, tag = 'input window, operand 4, single buffered']
    #allocation9 [shape = 's32[1]{0}', space=sflag, size = 0x4, scoped, tag = 'scoped memory for tpu_custom_call.1']
    #allocation10 [shape = 'u8[8192]{0}', space=vmem, size = 0x2000, scoped, tag = 'output window, operand 0, single buffered']
    %10 = vsyncpa [#allocation3], 0
    %11 = vsyncpa [#allocation6], 0
    %12 = vsyncpa [#allocation9], 0
    %13 = vsyncpa [#allocation4], 0
    // Predicated region
    $region2: #{tpu_custom_call.1} parent=1 // pred_check
      _
    $region3: #{tpu_custom_call.1} parent=1 // pred_check_branch
      %15 = sbr.rel (0) target = $region5
    $region4: #{tpu_custom_call.1} parent=1 // pred_region
      %17 = vsyncadd [#allocation3], 0
      %s18 = sshll.u32 %s0, 4
      %s19 = int_to_ptr.hbm [resolvable:$true] %s18
      %s20 = sshll.u32 [#allocation2], 4
      %s21 = int_to_ptr.vmem [resolvable:$true] %s20
      %26 = dma.hbm_to_vmem [thread:$0]  %s19, 256, %s21, [#allocation3], 128, 128, 8
    $region5: #{tpu_custom_call.1} parent=1 // pred_fallthru
      _
    // Predicated region
    $region6: #{tpu_custom_call.1} parent=1 // pred_check
      _
    $region7: #{tpu_custom_call.1} parent=1 // pred_check_branch
      %28 = sbr.rel (0) target = $region9
    $region8: #{tpu_custom_call.1} parent=1 // pred_region
      %30 = vsyncadd [#allocation6], 0
      %s31 = sshll.u32 %s1, 4
      %s32 = int_to_ptr.hbm [resolvable:$true] %s31
      %s33 = sshll.u32 [#allocation5], 4
      %s34 = int_to_ptr.vmem [resolvable:$true] %s33
      %39 = dma.hbm_to_vmem [thread:$0]  %s32, 256, %s34, [#allocation6], 128, 128, 8
    $region9: #{tpu_custom_call.1} parent=1 // pred_fallthru
      _
    // Predicated region
    $region10: #{tpu_custom_call.1} parent=1 // pred_check
      _
    $region11: #{tpu_custom_call.1} parent=1 // pred_check_branch
      %41 = sbr.rel (0) target = $region13
    $region12: #{tpu_custom_call.1} parent=1 // pred_region
      %43 = vsyncadd [#allocation6], 0
      %s44 = sshll.u32 %s2, 4
      %s45 = int_to_ptr.hbm [resolvable:$true] %s44
      %s46 = sshll.u32 [#allocation7], 4
      %s47 = int_to_ptr.vmem [resolvable:$true] %s46
      %52 = dma.hbm_to_vmem [thread:$0]  %s45, 512, %s47, [#allocation6], 128, 128, 8
    $region13: #{tpu_custom_call.1} parent=1 // pred_fallthru
      _
    // Predicated region
    $region14: #{tpu_custom_call.1} parent=1 // pred_check
      _
    $region15: #{tpu_custom_call.1} parent=1 // pred_check_branch
      %54 = sbr.rel (0) target = $region17
    $region16: #{tpu_custom_call.1} parent=1 // pred_region
      _
    $region17: #{tpu_custom_call.1} parent=1 // pred_fallthru
      _
    // Predicated region
    $region18: #{tpu_custom_call.1} parent=1 // pred_check
      _
    $region19: #{tpu_custom_call.1} parent=1 // pred_check_branch
      %56 = sbr.rel (0) target = $region21
    $region20: #{tpu_custom_call.1} parent=1 // pred_region
      %58 = vsyncadd [#allocation9], 0
      %s59 = sshll.u32 %s4, 4
      %s60 = int_to_ptr.hbm [resolvable:$true] %s59
      %s61 = sshll.u32 [#allocation8], 4
      %s62 = int_to_ptr.vmem [resolvable:$true] %s61
      %67 = dma.hbm_to_vmem [thread:$0]  %s60, 1024, %s62, [#allocation9], 128, 128, 8
    $region21: #{tpu_custom_call.1} parent=1 // pred_fallthru
      _
    // Predicated region
    $region22: #{tpu_custom_call.1} parent=1 // pred_check
      _
    $region23: #{tpu_custom_call.1} parent=1 // pred_check_branch
      %69 = sbr.rel (0) target = $region25
    $region24: #{tpu_custom_call.1} parent=1 // pred_region
      %71 = dma.done [#allocation3], 256
    $region25: #{tpu_custom_call.1} parent=1 // pred_fallthru
      _
    // Predicated region
    $region26: #{tpu_custom_call.1} parent=1 // pred_check
      _
    $region27: #{tpu_custom_call.1} parent=1 // pred_check_branch
      %73 = sbr.rel (0) target = $region29
    $region28: #{tpu_custom_call.1} parent=1 // pred_region
      %75 = dma.done [#allocation6], 256
    $region29: #{tpu_custom_call.1} parent=1 // pred_fallthru
      _
    // Predicated region
    $region30: #{tpu_custom_call.1} parent=1 // pred_check
      _
    $region31: #{tpu_custom_call.1} parent=1 // pred_check_branch
      %77 = sbr.rel (0) target = $region33
    $region32: #{tpu_custom_call.1} parent=1 // pred_region
      %79 = dma.done [#allocation6], 512
    $region33: #{tpu_custom_call.1} parent=1 // pred_fallthru
      _
    // Predicated region
    $region34: #{tpu_custom_call.1} parent=1 // pred_check
      _
    $region35: #{tpu_custom_call.1} parent=1 // pred_check_branch
      %81 = sbr.rel (0) target = $region37
    $region36: #{tpu_custom_call.1} parent=1 // pred_region
      %83 = dma.done [#allocation9], 1024
    $region37: #{tpu_custom_call.1} parent=1 // pred_fallthru
      _
    %v84 = vld [vmem:[#allocation2] sm:$0xff]
    %v85 = vld [vmem:[#allocation2 + $0x8] sm:$0xff]
    %v86 = vld [vmem:[%s3] sm:$0x1]
    %v87 = vld [vmem:[#allocation5] sm:$0xff]
    %v88 = vld [vmem:[#allocation5 + $0x8] sm:$0xff]
    %v90 = vperm.slane %v86, 0
    %vm92 = vcmask 130048
    %v94 = vsel %vm92, %v84, 0
    %v97 = vsel %vm92, %v85, 0
    %99 = vmatpush.msra.mxu0 0.0
    %100 = vmatpush.msra.mxu0 0.0
    %101 = vmatpush.msra.mxu0 0.0
    %102 = vmatpush.msra.mxu0 0.0
    %103 = vmatpush.msra.mxu0 0.0
    %104 = vmatpush.msra.mxu0 0.0
    %105 = vmatpush.msra.mxu0 0.0
    %106 = vmatpush.msra.mxu0 0.0
    %107 = vmatpush.msra.mxu0 0.0
    %108 = vmatpush.msra.mxu0 0.0
    %109 = vmatpush.msra.mxu0 0.0
    %110 = vmatpush.msra.mxu0 0.0
    %111 = vmatpush.msra.mxu0 0.0
    %112 = vmatpush.msra.mxu0 0.0
    %113 = vmatpush.msra.mxu0 %v88
    %114 = vmatpush.msra.mxu0 %v87
    %115 = vmatmul.f32.gmra.mxu0 %v94
    %v116 = vpop.f32.mrf.mxu0
    %v117 = vadd.f32 %v90, %v116
    %118 = vmatmul.f32.gmra.mxu0 %v97
    %v119 = vpop.f32.mrf.mxu0
    %v120 = vadd.f32 %v90, %v119
    %121 = vdwg.mxu0
    %v122 = vmul.f32 %v117, 0.35355338
    %v123 = vmul.f32 %v120, 0.35355338
    %126 = vrot.lane.b32.xlu0 %v122, 120
    %v127 = vpop.permute.xlu0 %126
    %128 = vrot.lane.b32.xlu0 %v123, 120
    %v129 = vpop.permute.xlu0 %128
    %130 = vrot.lane.b32.xlu0 %v122, 112
    %v131 = vpop.permute.xlu0 %130
    %132 = vrot.lane.b32.xlu0 %v123, 112
    %v133 = vpop.permute.xlu0 %132
    %134 = vrot.lane.b32.xlu0 %v122, 104
    %v135 = vpop.permute.xlu0 %134
    %136 = vrot.lane.b32.xlu0 %v123, 104
    %v137 = vpop.permute.xlu0 %136
    %140 = vrot.lane.b32.xlu0 %v117, 120
    %v141 = vpop.permute.xlu0 %140
    %142 = vrot.lane.b32.xlu0 %v120, 120
    %v143 = vpop.permute.xlu0 %142
    %144 = vrot.lane.b32.xlu0 %v117, 112
    %v145 = vpop.permute.xlu0 %144
    %146 = vrot.lane.b32.xlu0 %v120, 112
    %v147 = vpop.permute.xlu0 %146
    %148 = vrot.lane.b32.xlu0 %v117, 104
    %v149 = vpop.permute.xlu0 %148
    %150 = vrot.lane.b32.xlu0 %v120, 104
    %v151 = vpop.permute.xlu0 %150
    %152 = vrot.lane.b32.xlu0 %v117, 96
    %v153 = vpop.permute.xlu0 %152
    %154 = vrot.lane.b32.xlu0 %v120, 96
    %v155 = vpop.permute.xlu0 %154
    %156 = vrot.lane.b32.xlu0 %v141, 96
    %v157 = vpop.permute.xlu0 %156
    %158 = vrot.lane.b32.xlu0 %v143, 96
    %v159 = vpop.permute.xlu0 %158
    %160 = vrot.lane.b32.xlu0 %v145, 96
    %v161 = vpop.permute.xlu0 %160
    %162 = vrot.lane.b32.xlu0 %v147, 96
    %v163 = vpop.permute.xlu0 %162
    %164 = vrot.lane.b32.xlu0 %v149, 96
    %v165 = vpop.permute.xlu0 %164
    %166 = vrot.lane.b32.xlu0 %v151, 96
    %v167 = vpop.permute.xlu0 %166
    %vm168 = vcmask 64512
    %v169 = vsel %vm168, %v122, 0
    %v171 = vsel %vm168, %v123, 0
    %v173 = vsel %vm168, %v127, 0
    %v175 = vsel %vm168, %v129, 0
    %v177 = vsel %vm168, %v131, 0
    %v179 = vsel %vm168, %v133, 0
    %v181 = vsel %vm168, %v135, 0
    %v183 = vsel %vm168, %v137, 0
    %v185 = vsel %vm168, %v153, 0
    %v187 = vsel %vm168, %v155, 0
    %v189 = vsel %vm168, %v157, 0
    %v191 = vsel %vm168, %v159, 0
    %v193 = vsel %vm168, %v161, 0
    %v195 = vsel %vm168, %v163, 0
    %v197 = vsel %vm168, %v165, 0
    %v199 = vsel %vm168, %v167, 0
    %201 = vmatpush.xpose.msra.mxu0 0.0
    %202 = vmatpush.xpose.msra.mxu0 0.0
    %203 = vmatpush.xpose.msra.mxu0 0.0
    %204 = vmatpush.xpose.msra.mxu0 0.0
    %205 = vmatpush.xpose.msra.mxu0 0.0
    %206 = vmatpush.xpose.msra.mxu0 0.0
    %207 = vmatpush.xpose.msra.mxu0 0.0
    %208 = vmatpush.xpose.msra.mxu0 0.0
    %209 = vmatpush.xpose.msra.mxu0 %v199
    %210 = vmatpush.xpose.msra.mxu0 %v197
    %211 = vmatpush.xpose.msra.mxu0 %v195
    %212 = vmatpush.xpose.msra.mxu0 %v193
    %213 = vmatpush.xpose.msra.mxu0 %v191
    %214 = vmatpush.xpose.msra.mxu0 %v189
    %215 = vmatpush.xpose.msra.mxu0 %v187
    %216 = vmatpush.xpose.msra.mxu0 %v185
    %217 = vmatmul.f32.gmra.mxu0 %v169
    %v218 = vpop.f32.mrf.mxu0
    %v219 = vadd.f32 0.0, %v218
    %220 = vmatmul.f32.gmra.mxu0 %v171
    %v221 = vpop.f32.mrf.mxu0
    %v222 = vadd.f32 0.0, %v221
    %223 = vmatmul.f32.gmra.mxu0 %v173
    %v224 = vpop.f32.mrf.mxu0
    %v225 = vadd.f32 0.0, %v224
    %226 = vmatmul.f32.gmra.mxu0 %v175
    %v227 = vpop.f32.mrf.mxu0
    %v228 = vadd.f32 0.0, %v227
    %229 = vmatmul.f32.gmra.mxu0 %v177
    %v230 = vpop.f32.mrf.mxu0
    %v231 = vadd.f32 0.0, %v230
    %232 = vmatmul.f32.gmra.mxu0 %v179
    %v233 = vpop.f32.mrf.mxu0
    %v234 = vadd.f32 0.0, %v233
    %235 = vmatmul.f32.gmra.mxu0 %v181
    %v236 = vpop.f32.mrf.mxu0
    %v237 = vadd.f32 0.0, %v236
    %238 = vmatmul.f32.gmra.mxu0 %v183
    %v239 = vpop.f32.mrf.mxu0
    %v240 = vadd.f32 0.0, %v239
    %241 = vdwg.mxu0
    %v242 = vld [vmem:[#allocation8] sm:$0xff]
    %v243 = vld [vmem:[#allocation8 + $0x8] sm:$0xff]
    %v244 = vld [vmem:[#allocation8 + $0x10] sm:$0xff]
    %v245 = vld [vmem:[#allocation8 + $0x18] sm:$0xff]
    %v246 = vld [vmem:[#allocation8 + $0x20] sm:$0xff]
    %v247 = vld [vmem:[#allocation8 + $0x28] sm:$0xff]
    %v248 = vld [vmem:[#allocation8 + $0x30] sm:$0xff]
    %v249 = vld [vmem:[#allocation8 + $0x38] sm:$0xff]
    %vm250 = vcmp.ge.f32.partialorder %v242, 0.0
    %vm251 = vcmp.ge.f32.partialorder %v243, 0.0
    %vm252 = vcmp.ge.f32.partialorder %v244, 0.0
    %vm253 = vcmp.ge.f32.partialorder %v245, 0.0
    %vm254 = vcmp.ge.f32.partialorder %v246, 0.0
    %vm255 = vcmp.ge.f32.partialorder %v247, 0.0
    %vm256 = vcmp.ge.f32.partialorder %v248, 0.0
    %vm257 = vcmp.ge.f32.partialorder %v249, 0.0
    %v258 = vsel %vm250, %v219, %v242
    %v259 = vsel %vm251, %v222, %v243
    %v260 = vsel %vm252, %v225, %v244
    %v261 = vsel %vm253, %v228, %v245
    %v262 = vsel %vm254, %v231, %v246
    %v263 = vsel %vm255, %v234, %v247
    %v264 = vsel %vm256, %v237, %v248
    %v265 = vsel %vm257, %v240, %v249
    %vm266 = vcmask 523264
    %v267 = vsel %vm266, %v258, -inf
    %268 = vmax.xlane.f32.xlu0 %v267
    %v269 = vpop.xlane.xlu0 %268
    %v270 = vsel %vm266, %v259, -inf
    %271 = vmax.xlane.f32.xlu0 %v270
    %v272 = vpop.xlane.xlu0 %271
    %v273 = vsel %vm266, %v260, -inf
    %274 = vmax.xlane.f32.xlu0 %v273
    %v275 = vpop.xlane.xlu0 %274
    %v276 = vsel %vm266, %v261, -inf
    %277 = vmax.xlane.f32.xlu0 %v276
    %v278 = vpop.xlane.xlu0 %277
    %v279 = vsel %vm266, %v262, -inf
    %280 = vmax.xlane.f32.xlu0 %v279
    %v281 = vpop.xlane.xlu0 %280
    %v282 = vsel %vm266, %v263, -inf
    %283 = vmax.xlane.f32.xlu0 %v282
    %v284 = vpop.xlane.xlu0 %283
    %v285 = vsel %vm266, %v264, -inf
    %286 = vmax.xlane.f32.xlu0 %v285
    %v287 = vpop.xlane.xlu0 %286
    %v288 = vsel %vm266, %v265, -inf
    %289 = vmax.xlane.f32.xlu0 %v288
    %v290 = vpop.xlane.xlu0 %289
    %v291 = vsub.f32 %v258, %v269
    %v292 = vsub.f32 %v259, %v272
    %v293 = vsub.f32 %v260, %v275
    %v294 = vsub.f32 %v261, %v278
    %v295 = vsub.f32 %v262, %v281
    %v296 = vsub.f32 %v263, %v284
    %v297 = vsub.f32 %v264, %v287
    %v298 = vsub.f32 %v265, %v290
    %v299 = vmul.f32 %v291, 1.442695
    %v300 = vpow.pop %v299
    %v301 = vmul.f32 %v292, 1.442695
    %v302 = vpow.pop %v301
    %v303 = vmul.f32 %v293, 1.442695
    %v304 = vpow.pop %v303
    %v305 = vmul.f32 %v294, 1.442695
    %v306 = vpow.pop %v305
    %v307 = vmul.f32 %v295, 1.442695
    %v308 = vpow.pop %v307
    %v309 = vmul.f32 %v296, 1.442695
    %v310 = vpow.pop %v309
    %v311 = vmul.f32 %v297, 1.442695
    %v312 = vpow.pop %v311
    %v313 = vmul.f32 %v298, 1.442695
    %v314 = vpow.pop %v313
    %v315 = vsel %vm266, %v300, 0.0
    %316 = vadd.xlane.f32.xlu0 %v315
    %v317 = vpop.xlane.xlu0 %316
    %v318 = vsel %vm266, %v302, 0.0
    %319 = vadd.xlane.f32.xlu0 %v318
    %v320 = vpop.xlane.xlu0 %319
    %v321 = vsel %vm266, %v304, 0.0
    %322 = vadd.xlane.f32.xlu0 %v321
    %v323 = vpop.xlane.xlu0 %322
    %v324 = vsel %vm266, %v306, 0.0
    %325 = vadd.xlane.f32.xlu0 %v324
    %v326 = vpop.xlane.xlu0 %325
    %v327 = vsel %vm266, %v308, 0.0
    %328 = vadd.xlane.f32.xlu0 %v327
    %v329 = vpop.xlane.xlu0 %328
    %v330 = vsel %vm266, %v310, 0.0
    %331 = vadd.xlane.f32.xlu0 %v330
    %v332 = vpop.xlane.xlu0 %331
    %v333 = vsel %vm266, %v312, 0.0
    %334 = vadd.xlane.f32.xlu0 %v333
    %v335 = vpop.xlane.xlu0 %334
    %v336 = vsel %vm266, %v314, 0.0
    %337 = vadd.xlane.f32.xlu0 %v336
    %v338 = vpop.xlane.xlu0 %337
    %v339 = vrcp.pop %v317
    %v340 = vmul.f32 %v317, %v339
    %v341 = vsub.f32 1.0, %v340
    %v342 = vmul.f32 %v339, %v341
    %v343 = vadd.f32 %v339, %v342
    %vm344 = vweird.f32 %v317
    %vm345 = vweird.f32 %v339
    %vm346 = vmor %vm344, %vm345
    %v347 = vsel %vm346, %v339, %v343
    %v348 = vand.u32 2147483647, %v317
    %vm349 = vcmp.eq.f32.partialorder %v348, 8.507059e+37
    %v350 = vand.u32 %v317, 2147483648
    %v351 = vor.u32 1.1754944e-38, %v350
    %v352 = vsel %vm349, %v351, %v347
    %v353 = vrcp.pop %v320
    %v354 = vmul.f32 %v320, %v353
    %v355 = vsub.f32 1.0, %v354
    %v356 = vmul.f32 %v353, %v355
    %v357 = vadd.f32 %v353, %v356
    %vm358 = vweird.f32 %v320
    %vm359 = vweird.f32 %v353
    %vm360 = vmor %vm358, %vm359
    %v361 = vsel %vm360, %v353, %v357
    %v362 = vand.u32 2147483647, %v320
    %vm363 = vcmp.eq.f32.partialorder %v362, 8.507059e+37
    %v364 = vand.u32 %v320, 2147483648
    %v365 = vor.u32 1.1754944e-38, %v364
    %v366 = vsel %vm363, %v365, %v361
    %v367 = vrcp.pop %v323
    %v368 = vmul.f32 %v323, %v367
    %v369 = vsub.f32 1.0, %v368
    %v370 = vmul.f32 %v367, %v369
    %v371 = vadd.f32 %v367, %v370
    %vm372 = vweird.f32 %v323
    %vm373 = vweird.f32 %v367
    %vm374 = vmor %vm372, %vm373
    %v375 = vsel %vm374, %v367, %v371
    %v376 = vand.u32 2147483647, %v323
    %vm377 = vcmp.eq.f32.partialorder %v376, 8.507059e+37
    %v378 = vand.u32 %v323, 2147483648
    %v379 = vor.u32 1.1754944e-38, %v378
    %v380 = vsel %vm377, %v379, %v375
    %v381 = vrcp.pop %v326
    %v382 = vmul.f32 %v326, %v381
    %v383 = vsub.f32 1.0, %v382
    %v384 = vmul.f32 %v381, %v383
    %v385 = vadd.f32 %v381, %v384
    %vm386 = vweird.f32 %v326
    %vm387 = vweird.f32 %v381
    %vm388 = vmor %vm386, %vm387
    %v389 = vsel %vm388, %v381, %v385
    %v390 = vand.u32 2147483647, %v326
    %vm391 = vcmp.eq.f32.partialorder %v390, 8.507059e+37
    %v392 = vand.u32 %v326, 2147483648
    %v393 = vor.u32 1.1754944e-38, %v392
    %v394 = vsel %vm391, %v393, %v389
    %v395 = vrcp.pop %v329
    %v396 = vmul.f32 %v329, %v395
    %v397 = vsub.f32 1.0, %v396
    %v398 = vmul.f32 %v395, %v397
    %v399 = vadd.f32 %v395, %v398
    %vm400 = vweird.f32 %v329
    %vm401 = vweird.f32 %v395
    %vm402 = vmor %vm400, %vm401
    %v403 = vsel %vm402, %v395, %v399
    %v404 = vand.u32 2147483647, %v329
    %vm405 = vcmp.eq.f32.partialorder %v404, 8.507059e+37
    %v406 = vand.u32 %v329, 2147483648
    %v407 = vor.u32 1.1754944e-38, %v406
    %v408 = vsel %vm405, %v407, %v403
    %v409 = vrcp.pop %v332
    %v410 = vmul.f32 %v332, %v409
    %v411 = vsub.f32 1.0, %v410
    %v412 = vmul.f32 %v409, %v411
    %v413 = vadd.f32 %v409, %v412
    %vm414 = vweird.f32 %v332
    %vm415 = vweird.f32 %v409
    %vm416 = vmor %vm414, %vm415
    %v417 = vsel %vm416, %v409, %v413
    %v418 = vand.u32 2147483647, %v332
    %vm419 = vcmp.eq.f32.partialorder %v418, 8.507059e+37
    %v420 = vand.u32 %v332, 2147483648
    %v421 = vor.u32 1.1754944e-38, %v420
    %v422 = vsel %vm419, %v421, %v417
    %v423 = vrcp.pop %v335
    %v424 = vmul.f32 %v335, %v423
    %v425 = vsub.f32 1.0, %v424
    %v426 = vmul.f32 %v423, %v425
    %v427 = vadd.f32 %v423, %v426
    %vm428 = vweird.f32 %v335
    %vm429 = vweird.f32 %v423
    %vm430 = vmor %vm428, %vm429
    %v431 = vsel %vm430, %v423, %v427
    %v432 = vand.u32 2147483647, %v335
    %vm433 = vcmp.eq.f32.partialorder %v432, 8.507059e+37
    %v434 = vand.u32 %v335, 2147483648
    %v435 = vor.u32 1.1754944e-38, %v434
    %v436 = vsel %vm433, %v435, %v431
    %v437 = vrcp.pop %v338
    %v438 = vmul.f32 %v338, %v437
    %v439 = vsub.f32 1.0, %v438
    %v440 = vmul.f32 %v437, %v439
    %v441 = vadd.f32 %v437, %v440
    %vm442 = vweird.f32 %v338
    %vm443 = vweird.f32 %v437
    %vm444 = vmor %vm442, %vm443
    %v445 = vsel %vm444, %v437, %v441
    %v446 = vand.u32 2147483647, %v338
    %vm447 = vcmp.eq.f32.partialorder %v446, 8.507059e+37
    %v448 = vand.u32 %v338, 2147483648
    %v449 = vor.u32 1.1754944e-38, %v448
    %v450 = vsel %vm447, %v449, %v445
    %v451 = vmul.f32 %v300, %v352
    %v452 = vmul.f32 %v302, %v366
    %v453 = vmul.f32 %v304, %v380
    %v454 = vmul.f32 %v306, %v394
    %v455 = vmul.f32 %v308, %v408
    %v456 = vmul.f32 %v310, %v422
    %v457 = vmul.f32 %v312, %v436
    %v458 = vmul.f32 %v314, %v450
    %459 = vrot.lane.b32.xlu0 %v117, 64
    %v460 = vpop.permute.xlu0 %459
    %461 = vrot.lane.b32.xlu0 %v120, 64
    %v462 = vpop.permute.xlu0 %461
    %463 = vrot.lane.b32.xlu0 %v141, 64
    %v464 = vpop.permute.xlu0 %463
    %465 = vrot.lane.b32.xlu0 %v143, 64
    %v466 = vpop.permute.xlu0 %465
    %467 = vrot.lane.b32.xlu0 %v145, 64
    %v468 = vpop.permute.xlu0 %467
    %469 = vrot.lane.b32.xlu0 %v147, 64
    %v470 = vpop.permute.xlu0 %469
    %471 = vrot.lane.b32.xlu0 %v149, 64
    %v472 = vpop.permute.xlu0 %471
    %473 = vrot.lane.b32.xlu0 %v151, 64
    %v474 = vpop.permute.xlu0 %473
    %v484 = vsel %vm266, %v451, 0
    %v487 = vsel %vm266, %v452, 0
    %v490 = vsel %vm266, %v453, 0
    %v493 = vsel %vm266, %v454, 0
    %v496 = vsel %vm266, %v455, 0
    %v499 = vsel %vm266, %v456, 0
    %v502 = vsel %vm266, %v457, 0
    %v505 = vsel %vm266, %v458, 0
    %507 = vmatpush.msra.mxu0 0.0
    %508 = vmatpush.msra.mxu0 0.0
    %509 = vmatpush.msra.mxu0 0.0
    %510 = vmatpush.msra.mxu0 0.0
    %511 = vmatpush.msra.mxu0 0.0
    %512 = vmatpush.msra.mxu0 0.0
    %513 = vmatpush.msra.mxu0 0.0
    %514 = vmatpush.msra.mxu0 0.0
    %515 = vmatpush.msra.mxu0 %v474
    %516 = vmatpush.msra.mxu0 %v472
    %517 = vmatpush.msra.mxu0 %v470
    %518 = vmatpush.msra.mxu0 %v468
    %519 = vmatpush.msra.mxu0 %v466
    %520 = vmatpush.msra.mxu0 %v464
    %521 = vmatpush.msra.mxu0 %v462
    %522 = vmatpush.msra.mxu0 %v460
    %523 = vmatmul.f32.gmra.mxu0 %v484
    %v524 = vpop.f32.mrf.mxu0
    %v525 = vadd.f32 0.0, %v524
    %526 = vmatmul.f32.gmra.mxu0 %v487
    %v527 = vpop.f32.mrf.mxu0
    %v528 = vadd.f32 0.0, %v527
    %529 = vmatmul.f32.gmra.mxu0 %v490
    %v530 = vpop.f32.mrf.mxu0
    %v531 = vadd.f32 0.0, %v530
    %532 = vmatmul.f32.gmra.mxu0 %v493
    %v533 = vpop.f32.mrf.mxu0
    %v534 = vadd.f32 0.0, %v533
    %535 = vmatmul.f32.gmra.mxu0 %v496
    %v536 = vpop.f32.mrf.mxu0
    %v537 = vadd.f32 0.0, %v536
    %538 = vmatmul.f32.gmra.mxu0 %v499
    %v539 = vpop.f32.mrf.mxu0
    %v540 = vadd.f32 0.0, %v539
    %541 = vmatmul.f32.gmra.mxu0 %v502
    %v542 = vpop.f32.mrf.mxu0
    %v543 = vadd.f32 0.0, %v542
    %544 = vmatmul.f32.gmra.mxu0 %v505
    %v545 = vpop.f32.mrf.mxu0
    %v546 = vadd.f32 0.0, %v545
    %547 = vdwg.mxu0
    %550 = vrot.lane.b32.xlu0 %v531, 8
    %v551 = vpop.permute.xlu0 %550
    %552 = vrot.lane.b32.xlu0 %v534, 8
    %v553 = vpop.permute.xlu0 %552
    %558 = vrot.lane.b32.xlu0 %v537, 16
    %v559 = vpop.permute.xlu0 %558
    %560 = vrot.lane.b32.xlu0 %v540, 16
    %v561 = vpop.permute.xlu0 %560
    %566 = vrot.lane.b32.xlu0 %v543, 24
    %v567 = vpop.permute.xlu0 %566
    %568 = vrot.lane.b32.xlu0 %v546, 24
    %v569 = vpop.permute.xlu0 %568
    %v572 = vsel %vm168, %v525, %v551
    %v573 = vsel %vm168, %v528, %v553
    %v574 = vsel %vm92, %v572, %v559
    %v575 = vsel %vm92, %v573, %v561
    %vm576 = vcmask 195584
    %v577 = vsel %vm576, %v574, %v567
    %v578 = vsel %vm576, %v575, %v569
    %v579 = vld [vmem:[#allocation7] sm:$0xff]
    %v580 = vld [vmem:[#allocation7 + $0x8] sm:$0xff]
    %v581 = vld [vmem:[#allocation7 + $0x10] sm:$0xff]
    %v582 = vld [vmem:[#allocation7 + $0x18] sm:$0xff]
    %583 = vrot.lane.b32.xlu0 %v90, 32
    %v584 = vpop.permute.xlu0 %583
    %vm586 = vcmask 261120
    %v588 = vsel %vm586, %v577, 0
    %v591 = vsel %vm586, %v578, 0
    %593 = vmatpush.msra.mxu0 0.0
    %594 = vmatpush.msra.mxu0 0.0
    %595 = vmatpush.msra.mxu0 0.0
    %596 = vmatpush.msra.mxu0 0.0
    %597 = vmatpush.msra.mxu0 0.0
    %598 = vmatpush.msra.mxu0 0.0
    %599 = vmatpush.msra.mxu0 0.0
    %600 = vmatpush.msra.mxu0 0.0
    %601 = vmatpush.msra.mxu0 0.0
    %602 = vmatpush.msra.mxu0 0.0
    %603 = vmatpush.msra.mxu0 0.0
    %604 = vmatpush.msra.mxu0 0.0
    %605 = vmatpush.msra.mxu0 %v582
    %606 = vmatpush.msra.mxu0 %v581
    %607 = vmatpush.msra.mxu0 %v580
    %608 = vmatpush.msra.mxu0 %v579
    %609 = vmatmul.f32.gmra.mxu0 %v588
    %v610 = vpop.f32.mrf.mxu0
    %v611 = vadd.f32 %v584, %v610
    %612 = vmatmul.f32.gmra.mxu0 %v591
    %v613 = vpop.f32.mrf.mxu0
    %v614 = vadd.f32 %v584, %v613
    %615 = vdwg.mxu0
    %616 = vst.msk [vmem:[#allocation10] sm:$0xff] %vm586, %v611
    %617 = vst.msk [vmem:[#allocation10 + $0x8] sm:$0xff] %vm586, %v614
    // Predicated region
    $region38: #{tpu_custom_call.1} parent=1 // pred_check
      _
    $region39: #{tpu_custom_call.1} parent=1 // pred_check_branch
      %619 = sbr.rel (0) target = $region41
    $region40: #{tpu_custom_call.1} parent=1 // pred_region
      %621 = vsyncadd [#allocation4], 0
      %s622 = sshll.u32 [#allocation10], 4
      %s623 = int_to_ptr.vmem [resolvable:$true] %s622
      %s624 = sshll.u32 %s5, 4
      %s625 = int_to_ptr.hbm [resolvable:$true] %s624
      %630 = dma.vmem_to_hbm [thread:$0]  %s623, 256, %s625, [#allocation4], 128, 128, 8
    $region41: #{tpu_custom_call.1} parent=1 // pred_fallthru
      _
    // Predicated region
    $region42: #{tpu_custom_call.1} parent=1 // pred_check
      _
    $region43: #{tpu_custom_call.1} parent=1 // pred_check_branch
      %632 = sbr.rel (0) target = $region45
    $region44: #{tpu_custom_call.1} parent=1 // pred_region
      %634 = dma.done [#allocation4], 256
    $region45: #{tpu_custom_call.1} parent=1 // pred_fallthru
      _
    %635 = vsyncpa [#allocation3], 1
    %636 = vsyncpa [#allocation6], 1
    %637 = vsyncpa [#allocation9], 1
    %638 = vsyncpa [#allocation4], 1

</llo_original>
